<compile_context>
chip_gen: v7x
topology: tpu7x:2x2x1
jax: 0.10.0
libtpu: 0.0.40
codegen_flags: <defaults>
</compile_context>

<pallas_src>
import math

import jax
import jax.numpy as jnp
from jax import lax
from jax.experimental import pallas as pl
from jax.experimental.pallas import tpu as pltpu


def _round_up(v, m):
    return (v + m - 1) // m * m


def _tile_config():
    """Per-generation tile / VMEM-limit table (keyed on physical VMEM)."""
    try:
        vmem_phys = int(getattr(pltpu.get_tpu_info(), "vmem_capacity_bytes",
                                64 << 20))
    except Exception:  # unknown hardware / interpret mode -> conservative
        vmem_phys = 64 << 20
    if vmem_phys > (96 << 20):
        # v5e / v6e: 128 MiB physical VMEM per TensorCore.
        # Double-buffered footprint ~18 MiB; raise the scoped limit (v5e
        # defaults to 16 MiB, v6e to 32 MiB).
        return dict(tm=512, tn=512, tk=2048, vmem_limit=64 << 20)
    # v7x: 64 MiB physical per TensorCore -> cap footprint (~10 MiB here).
    return dict(tm=512, tn=512, tk=1024, vmem_limit=40 << 20)


# -----------------------------------------------------------------------------
# Tiled matmul + bias kernel:  o = x @ W.T + b   (MXU, f32 accumulation).
# Grid = (M/tm, N/tn, K/tk); K is the reduction axis (last, "arbitrary").
# -----------------------------------------------------------------------------
def _linear_kernel(x_ref, w_ref, b_ref, o_ref):
    # o_ref is float32 and its block index is K-invariant, so it stays
    # resident in VMEM across the K loop and doubles as the accumulator.
    k = pl.program_id(2)

    @pl.when(k == 0)
    def _():
        o_ref[...] = jnp.broadcast_to(b_ref[0:1, :], o_ref.shape)

    # W is in native (out_dim, in_dim) layout -> contract axis 1 of both.
    o_ref[...] += lax.dot_general(
        x_ref[...], w_ref[...],
        dimension_numbers=(((1,), (1,)), ((), ())),
        preferred_element_type=jnp.float32)


def linear_norm(x, weight, bias=None, *, compute_dtype=jnp.float32):
    """LinearNorm.forward: y = x @ weight.T + bias.

    x:      (..., in_dim)
    weight: (out_dim, in_dim)   -- torch nn.Linear layout, used as-is
    bias:   (out_dim,) or None
    compute_dtype: jnp.float32 (exact) or jnp.bfloat16 (faster; f32 accum).
    """
    *lead, in_dim = x.shape
    out_dim = weight.shape[0]
    m = int(math.prod(lead)) if lead else 1

    cfg = _tile_config()
    # (8,128)-aligned tiles, clamped to the (padded) problem size.
    tm = min(cfg["tm"], _round_up(m, 8))
    tn = min(cfg["tn"], _round_up(out_dim, 128))
    tk = min(cfg["tk"], _round_up(in_dim, 128))
    mp = _round_up(m, tm)
    np_ = _round_up(out_dim, tn)
    kp = _round_up(in_dim, tk)

    x2 = x.reshape(m, in_dim)
    if x2.dtype != compute_dtype:
        x2 = x2.astype(compute_dtype)
    w = weight if weight.dtype == compute_dtype else weight.astype(compute_dtype)
    b = (bias if bias is not None
         else jnp.zeros((out_dim,), jnp.float32)).astype(jnp.float32)

    # Conditional zero-padding (exact: padded rows/cols contribute nothing to
    # the dot product; padded bias columns are sliced off afterwards).
    if (mp, kp) != (m, in_dim):
        x2 = jnp.zeros((mp, kp), compute_dtype).at[:m, :in_dim].set(x2)
    if (np_, kp) != (out_dim, in_dim):
        w = jnp.zeros((np_, kp), compute_dtype).at[:out_dim, :in_dim].set(w)
    bp = jnp.broadcast_to(b.reshape(1, out_dim), (8, out_dim))
    if np_ != out_dim:
        bp = jnp.zeros((8, np_), jnp.float32).at[:, :out_dim].set(bp)

    grid = (mp // tm, np_ // tn, kp // tk)
    out = pl.pallas_call(
        _linear_kernel,
        out_shape=jax.ShapeDtypeStruct((mp, np_), jnp.float32),
        grid=grid,
        in_specs=[
            pl.BlockSpec((tm, tk), lambda i, j, k: (i, k)),   # x tile
            pl.BlockSpec((tn, tk), lambda i, j, k: (j, k)),   # W tile (native)
            pl.BlockSpec((8, tn), lambda i, j, k: (0, j)),    # bias rows
        ],
        out_specs=pl.BlockSpec((tm, tn), lambda i, j, k: (i, j)),
        compiler_params=pltpu.CompilerParams(
            dimension_semantics=("parallel", "parallel", "arbitrary"),
            vmem_limit_bytes=cfg["vmem_limit"]),
    )(x2, w, bp)

    return out[:m, :out_dim].reshape(*lead, out_dim)


# -----------------------------------------------------------------------------
# Deterministic parameter init matching the PyTorch module.
# -----------------------------------------------------------------------------
def init_linear_norm_params(key, in_dim, out_dim, use_bias=True,
                            w_init_gain="linear"):
    gain = 1.0  # torch.nn.init.calculate_gain('linear') == 1.0
    kw, kb = jax.random.split(key)
    bound = gain * math.sqrt(6.0 / (in_dim + out_dim))       # xavier_uniform_
    weight = jax.random.uniform(kw, (out_dim, in_dim), jnp.float32,
                                -bound, bound)
    if use_bias:
        blim = 1.0 / math.sqrt(in_dim)                       # torch Linear default
        b = jax.random.uniform(kb, (out_dim,), jnp.float32, -blim, blim)
    else:
        b = None
    return weight, b


if __name__ == "__main__":
    key = jax.random.PRNGKey(0)
    kx, kparam = jax.random.split(key)

    # Small shapes consistent with the module's forward.
    batch, seq, in_dim, out_dim = 2, 8, 32, 32
    x = jax.random.normal(kx, (batch, seq, in_dim), jnp.float32)
    weight, bias = init_linear_norm_params(kparam, in_dim, out_dim)

    out = jax.block_until_ready(linear_norm(x, weight, bias))
    assert out.shape == (batch, seq, out_dim) and out.dtype == jnp.float32
    assert bool(jnp.all(jnp.isfinite(out)))

    ref = jnp.einsum("bsk,nk->bsn", x, weight) + bias
    assert bool(jnp.allclose(out, ref, rtol=5e-2, atol=5e-2))

    # Non-tile-aligned shapes exercise the conditional-padding path.
    k2, k3 = jax.random.split(kx)
    x2 = jax.random.normal(k2, (3, 5, 160), jnp.float32)
    w2, b2 = init_linear_norm_params(k3, 160, 77)
    out2 = jax.block_until_ready(linear_norm(x2, w2, b2))
    assert out2.shape == (3, 5, 77)
    ref2 = jnp.einsum("bsk,nk->bsn", x2, w2) + b2
    assert bool(jnp.allclose(out2, ref2, rtol=5e-2, atol=5e-2))

    print("KERNEL_OK")
</pallas_src>

<mosaic_0001>
module attributes {stable_mosaic.version = 11 : i64} {
  func.func @_linear_kernel(%arg0: i32, %arg1: i32, %arg2: i32, %arg3: memref<16x128xf32, #tpu.memory_space<vmem>>, %arg4: memref<128x128xf32, #tpu.memory_space<vmem>>, %arg5: memref<8x128xf32, #tpu.memory_space<vmem>>, %arg6: memref<16x128xf32, #tpu.memory_space<vmem>>) attributes {dimension_semantics = [#tpu.dimension_semantics<parallel>, #tpu.dimension_semantics<parallel>, #tpu.dimension_semantics<arbitrary>], iteration_bounds = array<i64: 1, 1, 1>, scalar_prefetch = 0 : i64, scratch_operands = 0 : i64, tpu.core_type = #tpu.core_type<tc>, window_params = [{transform_indices = @transform_0, window_bounds = array<i64: 16, 128>}, {transform_indices = @transform_1, window_bounds = array<i64: 128, 128>}, {transform_indices = @transform_2, window_bounds = array<i64: 8, 128>}, {transform_indices = @transform_3, window_bounds = array<i64: 16, 128>}]} {
    %c0_i32 = arith.constant 0 : i32
    %0 = arith.cmpi eq, %arg2, %c0_i32 : i32
    %1 = arith.extui %0 : i1 to i32
    %c0_i32_0 = arith.constant 0 : i32
    %2 = arith.cmpi ne, %1, %c0_i32_0 : i32
    scf.if %2 {
      %c0_8 = arith.constant 0 : index
      %c0_9 = arith.constant 0 : index
      %9 = vector.load %arg5[%c0_8, %c0_9] : memref<8x128xf32, #tpu.memory_space<vmem>>, vector<1x128xf32>
      %10 = vector.shape_cast %9 : vector<1x128xf32> to vector<1x128xf32>
      %11 = vector.broadcast %10 : vector<1x128xf32> to vector<16x128xf32>
      %c0_10 = arith.constant 0 : index
      %c0_11 = arith.constant 0 : index
      %12 = vector.load %arg6[%c0_10, %c0_11] : memref<16x128xf32, #tpu.memory_space<vmem>>, vector<16x128xf32>
      tpu.vector_store %arg6[%c0_10, %c0_11], %11 {strides = array<i32>} : memref<16x128xf32, #tpu.memory_space<vmem>>, vector<16x128xf32>,
    } else {
    }
    %c0 = arith.constant 0 : index
    %c0_1 = arith.constant 0 : index
    %3 = vector.load %arg6[%c0, %c0_1] : memref<16x128xf32, #tpu.memory_space<vmem>>, vector<16x128xf32>
    %c0_2 = arith.constant 0 : index
    %c0_3 = arith.constant 0 : index
    %4 = vector.load %arg3[%c0_2, %c0_3] : memref<16x128xf32, #tpu.memory_space<vmem>>, vector<16x128xf32>
    %c0_4 = arith.constant 0 : index
    %c0_5 = arith.constant 0 : index
    %5 = vector.load %arg4[%c0_4, %c0_5] : memref<128x128xf32, #tpu.memory_space<vmem>>, vector<128x128xf32>
    %cst = arith.constant dense<0.000000e+00> : vector<16x128xf32>
    %6 = tpu.matmul %4, %5, %cst {dimension_numbers = #tpu.dot_dimension_numbers<[1], [1], [0], [0], [0, 0, 1, 0], [], []>} : vector<16x128xf32>, vector<128x128xf32>, vector<16x128xf32> -> vector<16x128xf32>
    %7 = arith.addf %3, %6 : vector<16x128xf32>
    %c0_6 = arith.constant 0 : index
    %c0_7 = arith.constant 0 : index
    %8 = vector.load %arg6[%c0_6, %c0_7] : memref<16x128xf32, #tpu.memory_space<vmem>>, vector<16x128xf32>
    tpu.vector_store %arg6[%c0_6, %c0_7], %7 {strides = array<i32>} : memref<16x128xf32, #tpu.memory_space<vmem>>, vector<16x128xf32>,
    return
  }
  func.func @transform_0(%arg0: i32, %arg1: i32, %arg2: i32) -> (i32, i32) {
    %c0_i32 = arith.constant 0 : i32
    return %arg0, %arg2 : i32, i32
  }
  func.func @transform_1(%arg0: i32, %arg1: i32, %arg2: i32) -> (i32, i32) {
    %c0_i32 = arith.constant 0 : i32
    return %arg1, %arg2 : i32, i32
  }
  func.func @transform_2(%arg0: i32, %arg1: i32, %arg2: i32) -> (i32, i32) {
    %c0_i32 = arith.constant 0 : i32
    %c0_i32_0 = arith.constant 0 : i32
    return %c0_i32, %arg1 : i32, i32
  }
  func.func @transform_3(%arg0: i32, %arg1: i32, %arg2: i32) -> (i32, i32) {
    %c0_i32 = arith.constant 0 : i32
    return %arg0, %arg1 : i32, i32
  }
}

</mosaic_0001>

<llo_original>
// kernel: tpu_custom_call.1
$region0: #{tpu_custom_call.1}
  #allocation0 [shape = 'u32[]', space=smem, size = 0x4, offset = 0x4, fixed_abs, tag = 'smem constant byte address 0x4 - core index']
  #allocation1 [shape = 'u32[144,128]{1,0:T(1,128)}', space=vmem, size = 0x12000, scoped, tag = 'internal scratch']
  %s0 = inlined_call_operand.hbm [shape: f32[16,128], index: 0, kind: input, shape index: {}]
  %s1 = inlined_call_operand.hbm [shape: f32[128,128], index: 1, kind: input, shape index: {}]
  %s2 = inlined_call_operand.hbm [shape: f32[8,128], index: 2, kind: input, shape index: {}]
  %s3 = inlined_call_operand.hbm [shape: f32[16,128], index: 3, kind: output, shape index: {}]
  %s4 = sld [smem:[#allocation0]]
  $region38: #{tpu_custom_call.1} parent=0
    _
  %s6 = ssub.s32 1, %s4
  %s7 = scalar_select 0, %s6, %s4
  $region1: #{tpu_custom_call.1} parent=0
    #allocation2 [shape = 'u8[8192]{0}', space=vmem, size = 0x2000, scoped, tag = 'input window, operand 0, single buffered']
    #allocation3 [shape = 's32[1]{0}', space=sflag, size = 0x4, scoped, tag = 'scoped memory for tpu_custom_call.1']
    #allocation4 [shape = 's32[1]{0}', space=sflag, size = 0x4, scoped, tag = 'scoped memory for tpu_custom_call.1']
    #allocation5 [shape = 'u8[65536]{0}', space=vmem, size = 0x10000, scoped, tag = 'input window, operand 1, single buffered']
    #allocation6 [shape = 's32[1]{0}', space=sflag, size = 0x4, scoped, tag = 'scoped memory for tpu_custom_call.1']
    #allocation7 [shape = 'u8[4096]{0}', space=vmem, size = 0x1000, scoped, tag = 'input window, operand 2, single buffered']
    #allocation8 [shape = 'u8[8192]{0}', space=vmem, size = 0x2000, scoped, tag = 'output window, operand 0, single buffered']
    %8 = vsyncpa [#allocation3], 0
    %9 = vsyncpa [#allocation6], 0
    %10 = vsyncpa [#allocation4], 0
    // Predicated region
    $region2: #{tpu_custom_call.1} parent=1 // pred_check
      _
    $region3: #{tpu_custom_call.1} parent=1 // pred_check_branch
      %12 = sbr.rel (0) target = $region5
    $region4: #{tpu_custom_call.1} parent=1 // pred_region
      %s14 = ssub.s32 256, 256
      %15 = vsyncadd [#allocation3], %s14
      %s16 = sshll.u32 [#allocation2], 4
      %s17 = int_to_ptr.vmem [resolvable:$true] %s16
      %22 = dma.hbm_to_vmem [thread:$0]  %s0, 256, %s17, [#allocation3], 128, 128, 8
    $region5: #{tpu_custom_call.1} parent=1 // pred_fallthru
      _
    // Predicated region
    $region6: #{tpu_custom_call.1} parent=1 // pred_check
      _
    $region7: #{tpu_custom_call.1} parent=1 // pred_check_branch
      %24 = sbr.rel (0) target = $region9
    $region8: #{tpu_custom_call.1} parent=1 // pred_region
      %s26 = ssub.s32 2048, 2048
      %27 = vsyncadd [#allocation6], %s26
      %s28 = sshll.u32 [#allocation5], 4
      %s29 = int_to_ptr.vmem [resolvable:$true] %s28
      %34 = dma.hbm_to_vmem [thread:$0]  %s1, 2048, %s29, [#allocation6], 128, 128, 8
    $region9: #{tpu_custom_call.1} parent=1 // pred_fallthru
      _
    // Predicated region
    $region10: #{tpu_custom_call.1} parent=1 // pred_check
      _
    $region11: #{tpu_custom_call.1} parent=1 // pred_check_branch
      %36 = sbr.rel (0) target = $region13
    $region12: #{tpu_custom_call.1} parent=1 // pred_region
      %s38 = ssub.s32 128, 128
      %39 = vsyncadd [#allocation6], %s38
      %s41 = sshll.u32 [#allocation7], 4
      %s42 = int_to_ptr.vmem [resolvable:$true] %s41
      %44 = dma.hbm_to_vmem [thread:$0]  %s2, 128, %s42, [#allocation6]
    $region13: #{tpu_custom_call.1} parent=1 // pred_fallthru
      _
    // Predicated region
    $region14: #{tpu_custom_call.1} parent=1 // pred_check
      _
    $region15: #{tpu_custom_call.1} parent=1 // pred_check_branch
      %46 = sbr.rel (0) target = $region17
    $region16: #{tpu_custom_call.1} parent=1 // pred_region
      %47 = dma.done [#allocation3], 256
    $region17: #{tpu_custom_call.1} parent=1 // pred_fallthru
      _
    // Predicated region
    $region18: #{tpu_custom_call.1} parent=1 // pred_check
      _
    $region19: #{tpu_custom_call.1} parent=1 // pred_check_branch
      %49 = sbr.rel (0) target = $region21
    $region20: #{tpu_custom_call.1} parent=1 // pred_region
      %50 = dma.done [#allocation6], 2048
    $region21: #{tpu_custom_call.1} parent=1 // pred_fallthru
      _
    // Predicated region
    $region22: #{tpu_custom_call.1} parent=1 // pred_check
      _
    $region23: #{tpu_custom_call.1} parent=1 // pred_check_branch
      %52 = sbr.rel (0) target = $region25
    $region24: #{tpu_custom_call.1} parent=1 // pred_region
      %53 = dma.done [#allocation6], 128
    $region25: #{tpu_custom_call.1} parent=1 // pred_fallthru
      _
    %p54 = scmp.eq.s32.totalorder 0, 0
    // Predicated region
    $region26: #{tpu_custom_call.1} parent=1 // pred_check
      %p55 = pneg %p54
    $region27: #{tpu_custom_call.1} parent=1 // pred_check_branch
      %57 = sbr.rel (%p55) target = $region29
    $region28: #{tpu_custom_call.1} parent=1 // pred_region
      %v58 = vld [vmem:[#allocation7] sm:$0x1]
      %v59 = vlaneseq
      %v60 = vshrl.u32 %v59, 7
      %v61 = vsub.s32 0, %v60
      %v62 = vrot.slane %v58, %v61
      %63 = vst [vmem:[#allocation8] sm:$0xff] %v62
      %64 = vst [vmem:[#allocation8 + $0x8] sm:$0xff] %v62
    $region29: #{tpu_custom_call.1} parent=1 // pred_fallthru
      _
    %v65 = vld [vmem:[#allocation8] sm:$0xff]
    %v66 = vld [vmem:[#allocation8 + $0x8] sm:$0xff]
    %v67 = vld [vmem:[#allocation2] sm:$0xff]
    %v68 = vld [vmem:[#allocation2 + $0x8] sm:$0xff]
    %v69 = vld [vmem:[#allocation5] sm:$0xff]
    %v70 = vld [vmem:[#allocation5 + $0x8] sm:$0xff]
    %v71 = vld [vmem:[#allocation5 + $0x10] sm:$0xff]
    %v72 = vld [vmem:[#allocation5 + $0x18] sm:$0xff]
    %v73 = vld [vmem:[#allocation5 + $0x20] sm:$0xff]
    %v74 = vld [vmem:[#allocation5 + $0x28] sm:$0xff]
    %v75 = vld [vmem:[#allocation5 + $0x30] sm:$0xff]
    %v76 = vld [vmem:[#allocation5 + $0x38] sm:$0xff]
    %v77 = vld [vmem:[#allocation5 + $0x40] sm:$0xff]
    %v78 = vld [vmem:[#allocation5 + $0x48] sm:$0xff]
    %v79 = vld [vmem:[#allocation5 + $0x50] sm:$0xff]
    %v80 = vld [vmem:[#allocation5 + $0x58] sm:$0xff]
    %v81 = vld [vmem:[#allocation5 + $0x60] sm:$0xff]
    %v82 = vld [vmem:[#allocation5 + $0x68] sm:$0xff]
    %v83 = vld [vmem:[#allocation5 + $0x70] sm:$0xff]
    %v84 = vld [vmem:[#allocation5 + $0x78] sm:$0xff]
    %85 = vmatprep.subr.mxu0 0.0
    %86 = vmatpush1.xpose.msra.mxu0 %v69
    %87 = vmatprep.subr.mxu0 0.0
    %88 = vmatpush1.xpose.msra.mxu0 %v70
    %89 = vmatprep.subr.mxu0 0.0
    %90 = vmatpush1.xpose.msra.mxu0 %v71
    %91 = vmatprep.subr.mxu0 0.0
    %92 = vmatpush1.xpose.msra.mxu0 %v72
    %93 = vmatprep.subr.mxu0 0.0
    %94 = vmatpush1.xpose.msra.mxu0 %v73
    %95 = vmatprep.subr.mxu0 0.0
    %96 = vmatpush1.xpose.msra.mxu0 %v74
    %97 = vmatprep.subr.mxu0 0.0
    %98 = vmatpush1.xpose.msra.mxu0 %v75
    %99 = vmatprep.subr.mxu0 0.0
    %100 = vmatpush1.xpose.msra.mxu0 %v76
    %101 = vmatprep.subr.mxu0 0.0
    %102 = vmatpush1.xpose.msra.mxu0 %v77
    %103 = vmatprep.subr.mxu0 0.0
    %104 = vmatpush1.xpose.msra.mxu0 %v78
    %105 = vmatprep.subr.mxu0 0.0
    %106 = vmatpush1.xpose.msra.mxu0 %v79
    %107 = vmatprep.subr.mxu0 0.0
    %108 = vmatpush1.xpose.msra.mxu0 %v80
    %109 = vmatprep.subr.mxu0 0.0
    %110 = vmatpush1.xpose.msra.mxu0 %v81
    %111 = vmatprep.subr.mxu0 0.0
    %112 = vmatpush1.xpose.msra.mxu0 %v82
    %113 = vmatprep.subr.mxu0 0.0
    %114 = vmatpush1.xpose.msra.mxu0 %v83
    %115 = vmatprep.subr.mxu0 0.0
    %116 = vmatpush1.xpose.msra.mxu0 %v84
    %117 = vmatprep.subr.mxu0 0.0
    %118 = vmatpush1.xpose.msra.mxu0 0.0
    %119 = vmatprep.subr.mxu0 0.0
    %120 = vmatpush1.xpose.msra.mxu0 0.0
    %121 = vmatprep.subr.mxu0 0.0
    %122 = vmatpush1.xpose.msra.mxu0 0.0
    %123 = vmatprep.subr.mxu0 0.0
    %124 = vmatpush1.xpose.msra.mxu0 0.0
    %125 = vmatprep.subr.mxu0 0.0
    %126 = vmatpush1.xpose.msra.mxu0 0.0
    %127 = vmatprep.subr.mxu0 0.0
    %128 = vmatpush1.xpose.msra.mxu0 0.0
    %129 = vmatprep.subr.mxu0 0.0
    %130 = vmatpush1.xpose.msra.mxu0 0.0
    %131 = vmatprep.subr.mxu0 0.0
    %132 = vmatpush1.xpose.msra.mxu0 0.0
    %133 = vmatprep.subr.mxu0 0.0
    %134 = vmatpush1.xpose.msra.mxu0 0.0
    %135 = vmatprep.subr.mxu0 0.0
    %136 = vmatpush1.xpose.msra.mxu0 0.0
    %137 = vmatprep.subr.mxu0 0.0
    %138 = vmatpush1.xpose.msra.mxu0 0.0
    %139 = vmatprep.subr.mxu0 0.0
    %140 = vmatpush1.xpose.msra.mxu0 0.0
    %141 = vmatprep.subr.mxu0 0.0
    %142 = vmatpush1.xpose.msra.mxu0 0.0
    %143 = vmatprep.subr.mxu0 0.0
    %144 = vmatpush1.xpose.msra.mxu0 0.0
    %145 = vmatprep.subr.mxu0 0.0
    %146 = vmatpush1.xpose.msra.mxu0 0.0
    %147 = vmatprep.subr.mxu0 0.0
    %148 = vmatpush1.xpose.msra.mxu0 0.0
    %149 = vmatprep.mubr.f32.mxu0 0.0
    %150 = vmatmul.mubr.f32.gmra.mrb[0].mxu0 %v67
    %v151 = vpop.f32.mrb[0].mxu0
    %v152 = vadd.f32 0.0, %v151
    %v153 = vpop.f32.mrb[0].mxu0
    %154 = vmatprep.mubr.f32.mxu0 0.0
    %155 = vmatmul.mubr.f32.gmra.mrb[0].mxu0 %v68
    %v156 = vpop.f32.mrb[0].mxu0
    %v157 = vadd.f32 0.0, %v156
    %v158 = vpop.f32.mrb[0].mxu0
    %159 = vdwg.mxu0
    %v160 = vadd.f32 %v65, %v152
    %v161 = vadd.f32 %v66, %v157
    %162 = vst [vmem:[#allocation8] sm:$0xff] %v160
    %163 = vst [vmem:[#allocation8 + $0x8] sm:$0xff] %v161
    // Predicated region
    $region30: #{tpu_custom_call.1} parent=1 // pred_check
      _
    $region31: #{tpu_custom_call.1} parent=1 // pred_check_branch
      %165 = sbr.rel (0) target = $region33
    $region32: #{tpu_custom_call.1} parent=1 // pred_region
      %s167 = ssub.s32 256, 256
      %168 = vsyncadd [#allocation4], %s167
      %s169 = sshll.u32 [#allocation8], 4
      %s170 = int_to_ptr.vmem [resolvable:$true] %s169
      %175 = dma.vmem_to_hbm [thread:$0]  %s170, 256, %s3, [#allocation4], 128, 128, 8
    $region33: #{tpu_custom_call.1} parent=1 // pred_fallthru
      _
    // Predicated region
    $region34: #{tpu_custom_call.1} parent=1 // pred_check
      _
    $region35: #{tpu_custom_call.1} parent=1 // pred_check_branch
      %177 = sbr.rel (0) target = $region37
    $region36: #{tpu_custom_call.1} parent=1 // pred_region
      %178 = dma.done [#allocation4], 256
    $region37: #{tpu_custom_call.1} parent=1 // pred_fallthru
      _
    %179 = vsyncpa [#allocation3], 1
    %180 = vsyncpa [#allocation6], 1
    %181 = vsyncpa [#allocation4], 1

</llo_original>
